<compile_context>
chip_gen: v7x
topology: tpu7x:2x2x1
jax: 0.10.0
libtpu: 0.0.40
codegen_flags: <defaults>
</compile_context>

<pallas_src>
import jax
import jax.numpy as jnp
from jax.experimental import pallas as pl
from jax.experimental.pallas import tpu as pltpu


def _bilinear_upsample_matrix(n: int) -> jnp.ndarray:
    """1-D 2x bilinear interpolation operator (align_corners=False; matches
    torch.nn.Upsample(mode='bilinear', scale_factor=2)). Rows sum to 1."""
    m = 2 * n
    dst = jnp.arange(m, dtype=jnp.float32)
    src = jnp.maximum((dst + 0.5) / 2.0 - 0.5, 0.0)
    i0 = jnp.floor(src).astype(jnp.int32)
    frac = src - i0.astype(jnp.float32)
    i1 = jnp.minimum(i0 + 1, n - 1)
    rows = jnp.arange(m)
    mat = jnp.zeros((m, n), jnp.float32)
    mat = mat.at[rows, i0].add(1.0 - frac)
    mat = mat.at[rows, i1].add(frac)
    return mat


# ------------- kernel 1: folded channel affine (conv1+BN+BN+conv2+BN) -------

def _channel_mix_kernel(x_ref, a_ref, t_ref):
    # x_ref: (Cin, TS)   bf16  flattened-spatial tile of one image
    # a_ref: (Cout, Cin) bf16  folded channel affine (constant, VMEM-resident)
    # t_ref: (Cout, TS)  bf16
    t_ref[...] = jnp.dot(a_ref[...], x_ref[...],
                         preferred_element_type=jnp.float32).astype(t_ref.dtype)


def _spatial_tiling(hw, cin, cout, cap_bytes=4 << 20):
    """(tile, padded_hw) for the flattened spatial axis: largest 128-aligned
    tile keeping the double-buffered bf16 in+out blocks under cap_bytes.
    If hw has no suitable divisor we pad (the channel mix is pointwise)."""
    max_ts = max(128, (cap_bytes // (4 * (cin + cout))) // 128 * 128)
    if hw <= max_ts:
        return hw, hw
    t = max_ts
    while t >= 128:
        if hw % t == 0:
            return t, hw
        t -= 128
    padded = pl.cdiv(hw, max_ts) * max_ts        # rare: pad instead of blowing VMEM
    return max_ts, padded


# -------- kernel 2: separable 2x bilinear upsample + bias + sigmoid ---------

def _upsample_kernel(c_ref, t_ref, uh_ref, uwt_ref, o_ref):
    # c_ref  : (Cout,)  f32 SMEM  folded bias (scalar-prefetched)
    # t_ref  : (H, W)   bf16      channel-mixed plane for (n, co)
    # uh_ref : (TR, H)  bf16      row tile of the H-axis upsample operator
    # uwt_ref: (W, 2W)  bf16      W-axis upsample operator (transposed)
    # o_ref  : (TR, 2W) f32
    co = pl.program_id(1)
    u = jnp.dot(uh_ref[...], t_ref[...], preferred_element_type=jnp.float32)
    z = jnp.dot(u.astype(jnp.bfloat16), uwt_ref[...],
                preferred_element_type=jnp.float32)
    z = z + c_ref[co]
    # sigmoid = 1/(1+exp(-z)): exp on the EUP, approx reciprocal on the EUP.
    o_ref[...] = pl.reciprocal(1.0 + jnp.exp(-z), approx=True)


def _pick_row_tile(rows, w2, cap_bytes=2 << 20):
    """Output-row tile (multiple of 8 dividing 2H) keeping the f32 out block
    under cap_bytes; falls back to the full axis only if 2H has no such
    divisor (H not a multiple of 4), which stays small anyway."""
    if rows * w2 * 4 <= cap_bytes or rows <= 8:
        return rows
    t = min(rows, max(8, (cap_bytes // (w2 * 4)) // 8 * 8))
    while t >= 8:
        if rows % t == 0:
            return t
        t -= 8
    return rows


def outconv_forward(x_nchw, params):
    N, Cin, H, W = x_nchw.shape
    Cout = params["w1"].shape[0]
    Ho, Wo = 2 * H, 2 * W
    eps = 1e-5

    # ---- parameter folding (trace-time glue on constants only) --------------
    def bn_fold(g, b, rm, rv):
        s = g / jnp.sqrt(rv + eps)
        return s, b - rm * s

    s1, t1 = bn_fold(params["bn1_g"], params["bn1_b"], params["bn1_rm"], params["bn1_rv"])
    s2, t2 = bn_fold(params["bn2_g"], params["bn2_b"], params["bn2_rm"], params["bn2_rv"])
    s3, t3 = bn_fold(params["bn3_g"], params["bn3_b"], params["bn3_rm"], params["bn3_rv"])

    w1 = params["w1"].reshape(Cout, Cin)
    w2 = params["w2"].reshape(Cout, Cout)
    # Per-pixel channel affine  v -> A v + c  for conv1+BN1+BN2+conv2+BN3.
    d = (s1 * s2)[:, None] * w1                      # diag(s1*s2) @ W1
    e = s2 * (s1 * params["b1"] + t1) + t2           # folded inner bias/shift
    A = s3[:, None] * (w2 @ d)                       # (Cout, Cin)
    c = s3 * (w2 @ e + params["b2"]) + t3            # (Cout,)

    a_bf16 = A.astype(jnp.bfloat16)
    uh = _bilinear_upsample_matrix(H).astype(jnp.bfloat16)     # (2H, H)
    uwt = _bilinear_upsample_matrix(W).T.astype(jnp.bfloat16)  # (W, 2W)
    c_f32 = c.astype(jnp.float32)

    # ---- stage 1: channel mix on the (Cin, H*W) flattened view --------------
    hw = H * W
    ts, hw_p = _spatial_tiling(hw, Cin, Cout)
    xf = x_nchw.reshape(N, Cin, hw).astype(jnp.bfloat16)       # cast ONCE here
    if hw_p != hw:
        xf = jnp.pad(xf, ((0, 0), (0, 0), (0, hw_p - hw)))

    t = pl.pallas_call(
        _channel_mix_kernel,
        out_shape=jax.ShapeDtypeStruct((N, Cout, hw_p), jnp.bfloat16),
        grid_spec=pltpu.PrefetchScalarGridSpec(
            num_scalar_prefetch=0,
            grid=(N, hw_p // ts),
            in_specs=[
                pl.BlockSpec((pl.Squeezed(), Cin, ts), lambda n, s: (n, 0, s)),
                pl.BlockSpec((Cout, Cin), lambda n, s: (0, 0)),   # resident constant
            ],
            out_specs=pl.BlockSpec((pl.Squeezed(), Cout, ts), lambda n, s: (n, 0, s)),
        ),
        compiler_params=pltpu.CompilerParams(
            dimension_semantics=("parallel", "parallel"),
            vmem_limit_bytes=32 * 1024 * 1024,
        ),
    )(xf, a_bf16)

    if hw_p != hw:
        t = t[:, :, :hw]
    t = t.reshape(N, Cout, H, W)        # free view of contiguous HBM

    # ---- stage 2: separable 2x bilinear upsample + bias + sigmoid -----------
    tr = _pick_row_tile(Ho, Wo)
    out = pl.pallas_call(
        _upsample_kernel,
        out_shape=jax.ShapeDtypeStruct((N, Cout, Ho, Wo), jnp.float32),
        grid_spec=pltpu.PrefetchScalarGridSpec(
            num_scalar_prefetch=1,      # folded bias -> SMEM scalars
            grid=(N, Cout, Ho // tr),
            in_specs=[
                pl.BlockSpec((pl.Squeezed(), pl.Squeezed(), H, W),
                             lambda n, co, r, cb: (n, co, 0, 0)),
                pl.BlockSpec((tr, H), lambda n, co, r, cb: (r, 0)),
                pl.BlockSpec((W, Wo), lambda n, co, r, cb: (0, 0)),   # resident
            ],
            out_specs=pl.BlockSpec((pl.Squeezed(), pl.Squeezed(), tr, Wo),
                                   lambda n, co, r, cb: (n, co, r, 0)),
        ),
        compiler_params=pltpu.CompilerParams(
            dimension_semantics=("parallel", "parallel", "parallel"),
            vmem_limit_bytes=32 * 1024 * 1024,
        ),
    )(c_f32, t, uh, uwt)
    return out


def _reference_forward(x_nchw, params):
    """Pure-JAX reference in the ORIGINAL op order:
    upsample -> conv1 -> BN -> BN -> conv2 -> BN -> sigmoid (f32)."""
    N, Cin, H, W = x_nchw.shape
    Cout = params["w1"].shape[0]
    eps = 1e-5
    Uh = _bilinear_upsample_matrix(H)
    Uw = _bilinear_upsample_matrix(W)
    up = jnp.einsum("ih,jw,nchw->ncij", Uh, Uw, x_nchw)

    def bn(v, pfx):
        s = params[f"{pfx}_g"] / jnp.sqrt(params[f"{pfx}_rv"] + eps)
        t = params[f"{pfx}_b"] - params[f"{pfx}_rm"] * s
        return v * s[None, :, None, None] + t[None, :, None, None]

    w1 = params["w1"].reshape(Cout, Cin)
    a = jnp.einsum("oc,ncij->noij", w1, up) + params["b1"][None, :, None, None]
    a = bn(a, "bn1")
    a = bn(a, "bn2")
    w2 = params["w2"].reshape(Cout, Cout)
    a = jnp.einsum("oc,ncij->noij", w2, a) + params["b2"][None, :, None, None]
    a = bn(a, "bn3")
    return jax.nn.sigmoid(a)


def init_params(key, in_channels, out_channels):
    assert in_channels == out_channels, "reference module requires Cin == Cout"
    ks = jax.random.split(key, 16)

    def n(k, shape, scale=0.3):
        return scale * jax.random.normal(k, shape, jnp.float32)

    p = {
        "w1": n(ks[0], (out_channels, in_channels, 1, 1)),
        "b1": n(ks[1], (out_channels,)),
        "w2": n(ks[2], (out_channels, in_channels, 1, 1)),
        "b2": n(ks[3], (out_channels,)),
    }
    for i, base in enumerate(("bn1", "bn2", "bn3")):
        k0, k1, k2, k3 = ks[4 + 4 * i: 8 + 4 * i]
        p[f"{base}_g"] = 1.0 + 0.1 * jax.random.normal(k0, (out_channels,), jnp.float32)
        p[f"{base}_b"] = n(k1, (out_channels,))
        p[f"{base}_rm"] = n(k2, (out_channels,))
        p[f"{base}_rv"] = 0.5 + jax.random.uniform(k3, (out_channels,), jnp.float32)
    return p


if __name__ == "__main__":
    key = jax.random.PRNGKey(0)
    kx, kp = jax.random.split(key)
    in_channels = out_channels = 4
    x = jax.random.normal(kx, (2, in_channels, 16, 16), jnp.float32)
    params = init_params(kp, in_channels, out_channels)

    y = outconv_forward(x, params)
    jax.block_until_ready(y)

    assert y.shape == (2, out_channels, 32, 32), y.shape
    assert bool(jnp.all(jnp.isfinite(y)))
    # sigmoid range; +1e-3 slack for the EUP approx-reciprocal path
    assert bool(jnp.all((y >= 0.0) & (y <= 1.0 + 1e-3)))

    # correctness vs. pure-JAX reference in the original op order (bf16 MXU
    # matmuls with f32 accumulation + approx reciprocal -> loose tolerance)
    y_ref = _reference_forward(x, params)
    err = float(jnp.max(jnp.abs(y - y_ref)))
    assert err < 3e-2, f"max |kernel - reference| = {err}"

    print("KERNEL_OK")
</pallas_src>

<mosaic_0001>
module attributes {stable_mosaic.version = 11 : i64} {
  func.func @_channel_mix_kernel(%arg0: i32, %arg1: i32, %arg2: memref<1x4x256xbf16, #tpu.memory_space<vmem>>, %arg3: memref<4x4xbf16, #tpu.memory_space<vmem>>, %arg4: memref<1x4x256xbf16, #tpu.memory_space<vmem>>) attributes {dimension_semantics = [#tpu.dimension_semantics<parallel>, #tpu.dimension_semantics<parallel>], iteration_bounds = array<i64: 2, 1>, scalar_prefetch = 0 : i64, scratch_operands = 0 : i64, tpu.core_type = #tpu.core_type<tc>, window_params = [{transform_indices = @transform_0, window_bounds = array<i64: 1, 4, 256>}, {pipeline_mode = #tpu.pipeline_mode<synchronous>, transform_indices = @transform_1, window_bounds = array<i64: 4, 4>}, {transform_indices = @transform_2, window_bounds = array<i64: 1, 4, 256>}]} {
    %c0 = arith.constant 0 : index
    %c0_0 = arith.constant 0 : index
    %0 = vector.load %arg3[%c0, %c0_0] : memref<4x4xbf16, #tpu.memory_space<vmem>>, vector<4x4xbf16>
    %c0_1 = arith.constant 0 : index
    %c0_2 = arith.constant 0 : index
    %c0_3 = arith.constant 0 : index
    %1 = vector.load %arg2[%c0_1, %c0_2, %c0_3] : memref<1x4x256xbf16, #tpu.memory_space<vmem>>, vector<1x4x256xbf16>
    %2 = vector.shape_cast %1 : vector<1x4x256xbf16> to vector<4x256xbf16>
    %cst = arith.constant dense<0.000000e+00> : vector<4x256xf32>
    %3 = tpu.matmul %0, %2, %cst {dimension_numbers = #tpu.dot_dimension_numbers<[1], [0], [0], [1], [0, 0, 1, 1], [], []>} : vector<4x4xbf16>, vector<4x256xbf16>, vector<4x256xf32> -> vector<4x256xf32>
    %4 = arith.truncf %3 : vector<4x256xf32> to vector<4x256xbf16>
    %c0_4 = arith.constant 0 : index
    %c0_5 = arith.constant 0 : index
    %c0_6 = arith.constant 0 : index
    %5 = vector.load %arg4[%c0_4, %c0_5, %c0_6] : memref<1x4x256xbf16, #tpu.memory_space<vmem>>, vector<1x4x256xbf16>
    %6 = vector.shape_cast %5 : vector<1x4x256xbf16> to vector<4x256xbf16>
    %7 = vector.shape_cast %4 : vector<4x256xbf16> to vector<1x4x256xbf16>
    tpu.vector_store %arg4[%c0_4, %c0_5, %c0_6], %7 {strides = array<i32>} : memref<1x4x256xbf16, #tpu.memory_space<vmem>>, vector<1x4x256xbf16>,
    return
  }
  func.func @transform_0(%arg0: i32, %arg1: i32) -> (i32, i32, i32) {
    %c0_i32 = arith.constant 0 : i32
    %c0_i32_0 = arith.constant 0 : i32
    return %arg0, %c0_i32, %arg1 : i32, i32, i32
  }
  func.func @transform_1(%arg0: i32, %arg1: i32) -> (i32, i32) {
    %c0_i32 = arith.constant 0 : i32
    %c0_i32_0 = arith.constant 0 : i32
    %c0_i32_1 = arith.constant 0 : i32
    return %c0_i32, %c0_i32_0 : i32, i32
  }
  func.func @transform_2(%arg0: i32, %arg1: i32) -> (i32, i32, i32) {
    %c0_i32 = arith.constant 0 : i32
    %c0_i32_0 = arith.constant 0 : i32
    return %arg0, %c0_i32, %arg1 : i32, i32, i32
  }
}

</mosaic_0001>

<llo_original>
// kernel: tpu_custom_call.1
$region0: #{tpu_custom_call.1}
  #allocation0 [shape = 'u32[]', space=smem, size = 0x4, offset = 0x4, fixed_abs, tag = 'smem constant byte address 0x4 - core index']
  #allocation1 [shape = 'u32[144,128]{1,0:T(1,128)}', space=vmem, size = 0x12000, scoped, tag = 'internal scratch']
  %s0 = inlined_call_operand.hbm [shape: bf16[2,4,256], index: 0, kind: input, shape index: {}]
  %s1 = inlined_call_operand.vmem [shape: bf16[4,4], index: 1, kind: input, shape index: {}]
  %s2 = inlined_call_operand.hbm [shape: bf16[2,4,256], index: 2, kind: output, shape index: {}]
  %s3 = sld [smem:[#allocation0]]
  $region45: #{tpu_custom_call.1} parent=0
    _
  %s5 = ssub.s32 1, %s3
  %s6 = scalar_select 0, %s5, %s3
  $region1: #{tpu_custom_call.1} parent=0
    #allocation2 [shape = 'u8[4096]{0}', space=vmem, size = 0x1000, scoped, tag = 'input window, operand 0']
    #allocation3 [shape = 's32[2]{0}', space=sflag, size = 0x8, scoped, tag = 'scoped memory for tpu_custom_call.1']
    #allocation4 [shape = 's32[2]{0}', space=sflag, size = 0x8, scoped, tag = 'scoped memory for tpu_custom_call.1']
    #allocation5 [shape = 'u8[4096]{0}', space=vmem, size = 0x1000, scoped, tag = 'output window, operand 0']
    %7 = vsyncpa [#allocation3], 0
    %s8 = scalar_lea.sflag [#allocation3], 1
    %9 = vsyncpa %s8, 0
    %10 = vsyncpa [#allocation4], 0
    %s11 = scalar_lea.sflag [#allocation4], 1
    %12 = vsyncpa %s11, 0
    loop: start=0, step=1, limit=4
    $region2: #{tpu_custom_call.1} parent=1 // loop_pre_header
      _
    $region3: #{tpu_custom_call.1} parent=1 // loop_header
      %s14 = sphi 0, %s18
      %p15 = scmp.ge.s32.totalorder %s14, 4
      %s21 = sphi 0, %s33
      %s22 = sphi 0, %s29
      %s23 = sphi 0, %s21
      %s24 = sphi 0, %s22
      %s25 = sphi 0, %s23
      %s26 = sphi 0, %s24
      %s38 = sphi 0, %s40
      %s41 = sphi 0, %s38
      %s42 = sphi 0, %s41
      %s58 = sphi 0, %s42
      %s62 = sphi 0, %s62
      %s64 = sphi 0, %s62
      %s65 = sphi 0, %s64
      %s79 = sphi 0, %s65
      %s87 = sphi 0, %s89
      %s90 = sphi 0, %s87
      %s91 = sphi 0, %s90
      %s107 = sphi 0, %s91
    $region4: #{tpu_custom_call.1} parent=1 // loop_header_branch
      %17 = sbr.rel (%p15) target = $region8
    $region5: #{tpu_custom_call.1} parent=1 // loop_body
      %s19 = ssub.s32 %s14, 1
      %s20 = ssub.s32 %s14, 2
      %s27 = sadd.s32 1, %s22
      %p28 = scmp.ge.s32.totalorder %s27, 1
      %s29 = scalar_select %p28, 0, %s27
      %s30 = sadd.s32 1, %s21
      %s31 = scalar_select %p28, %s30, %s21
      %p32 = scmp.ge.s32.totalorder %s31, 2
      %s33 = scalar_select %p32, 0, %s31
      %s34 = ssub.s32 %s21, %s33
      %s35 = ssub.s32 %s22, %s29
      %s36 = sor.u32 %s34, %s35
      %p37 = scmp.eq.s32.totalorder %s36, 0
      %s39 = sadd.s32 %s38, 1
      %s40 = scalar_select %p37, %s38, %s39
      %p43 = pneg %p37
      %p44 = scmp.eq.s32.totalorder %s14, 1
      %p45 = por %p43, %p44
      %p46 = scmp.ne.s32.totalorder %s38, %s41
      %p47 = scmp.eq.s32.totalorder %s14, 0
      %p48 = por %p46, %p47
      %p49 = scmp.ne.s32.totalorder %s38, %s41
      %p50 = scmp.eq.s32.totalorder %s19, 1
      %p51 = por %p49, %p50
      %p52 = scmp.ne.s32.totalorder %s41, %s42
      %p53 = scmp.eq.s32.totalorder %s19, 0
      %p54 = por %p52, %p53
      %p55 = scmp.ne.s32.totalorder %s41, %s42
      %p56 = scmp.eq.s32.totalorder %s20, 1
      %p57 = por %p55, %p56
      %p59 = scmp.ne.s32.totalorder %s42, %s58
      %p60 = scmp.eq.s32.totalorder %s20, 0
      %p61 = por %p59, %p60
      %s63 = sadd.s32 %s62, 1
      %p66 = scmp.eq.s32.totalorder %s14, 1
      %p67 = scmp.ne.s32.totalorder %s62, %s64
      %p68 = scmp.eq.s32.totalorder %s14, 0
      %p69 = por %p67, %p68
      %p70 = scmp.ne.s32.totalorder %s62, %s64
      %p71 = scmp.eq.s32.totalorder %s19, 1
      %p72 = por %p70, %p71
      %p73 = scmp.ne.s32.totalorder %s64, %s65
      %p74 = scmp.eq.s32.totalorder %s19, 0
      %p75 = por %p73, %p74
      %p76 = scmp.ne.s32.totalorder %s64, %s65
      %p77 = scmp.eq.s32.totalorder %s20, 1
      %p78 = por %p76, %p77
      %p80 = scmp.ne.s32.totalorder %s65, %s79
      %p81 = scmp.eq.s32.totalorder %s20, 0
      %p82 = por %p80, %p81
      %s83 = ssub.s32 %s21, %s33
      %s84 = ssub.s32 %s22, %s29
      %s85 = sor.u32 %s83, %s84
      %p86 = scmp.eq.s32.totalorder %s85, 0
      %s88 = sadd.s32 %s87, 1
      %s89 = scalar_select %p86, %s87, %s88
      %p92 = pneg %p86
      %p93 = scmp.eq.s32.totalorder %s14, 1
      %p94 = por %p92, %p93
      %p95 = scmp.ne.s32.totalorder %s87, %s90
      %p96 = scmp.eq.s32.totalorder %s14, 0
      %p97 = por %p95, %p96
      %p98 = scmp.ne.s32.totalorder %s87, %s90
      %p99 = scmp.eq.s32.totalorder %s19, 1
      %p100 = por %p98, %p99
      %p101 = scmp.ne.s32.totalorder %s90, %s91
      %p102 = scmp.eq.s32.totalorder %s19, 0
      %p103 = por %p101, %p102
      %p104 = scmp.ne.s32.totalorder %s90, %s91
      %p105 = scmp.eq.s32.totalorder %s20, 1
      %p106 = por %p104, %p105
      %p108 = scmp.ne.s32.totalorder %s91, %s107
      %p109 = scmp.eq.s32.totalorder %s20, 0
      %p110 = por %p108, %p109
      %p111 = scmp.le.s32.totalorder 1, %s14
      %p112 = scmp.lt.s32.totalorder %s14, 3
      %p113 = pnand %p111, %p112
      %p114 = pneg %p113
      // Predicated region
      $region9: #{tpu_custom_call.1} parent=5 // pred_check
        _
      $region10: #{tpu_custom_call.1} parent=5 // pred_check_branch
        %116 = sbr.rel (%p113) target = $region12
      $region11: #{tpu_custom_call.1} parent=5 // pred_region
        %s117 = ssub.s32 %s14, 1
        // Predicated region
        $region13: #{tpu_custom_call.1} parent=11 // pred_check
          %p118 = pneg %p75
        $region14: #{tpu_custom_call.1} parent=11 // pred_check_branch
          %120 = sbr.rel (%p118) target = $region16
        $region15: #{tpu_custom_call.1} parent=11 // pred_region
          _
        $region16: #{tpu_custom_call.1} parent=11 // pred_fallthru
          _
      $region12: #{tpu_custom_call.1} parent=5 // pred_fallthru
        _
      %p121 = scmp.lt.s32.totalorder %s14, 2
      // Predicated region
      $region17: #{tpu_custom_call.1} parent=5 // pred_check
        %p122 = pneg %p121
      $region18: #{tpu_custom_call.1} parent=5 // pred_check_branch
        %124 = sbr.rel (%p122) target = $region20
      $region19: #{tpu_custom_call.1} parent=5 // pred_region
        // Predicated region
        $region21: #{tpu_custom_call.1} parent=19 // pred_check
          %p125 = pneg %p48
        $region22: #{tpu_custom_call.1} parent=19 // pred_check_branch
          %127 = sbr.rel (%p125) target = $region24
        $region23: #{tpu_custom_call.1} parent=19 // pred_region
          %s128 = sand.u32 %s38, 1
          %s129 = scalar_lea.sflag [#allocation3], %s128
          %s130 = sand.u32 %s38, 1
          %s131 = smul.addr %s130, 4
          %s132 = scalar_lea.vmem [#allocation2], %s131
          %s133 = smul.u32 2, %s22
          %s135 = ssub.s32 64, 64
          %136 = vsyncadd %s129, %s135
          %s137 = smul.addr %s21, 2
          %s138 = sadd.s32 %s133, %s137
          %s139 = smul.addr %s138, 32
          %s140 = scalar_lea.hbm %s0, %s139
          %s142 = sshll.u32 %s132, 4
          %s143 = int_to_ptr.vmem [resolvable:$true] %s142
          %145 = dma.hbm_to_vmem [thread:$0]  %s140, 64, %s143, %s129
        $region24: #{tpu_custom_call.1} parent=19 // pred_fallthru
          _
      $region20: #{tpu_custom_call.1} parent=5 // pred_fallthru
        _
      %p146 = scmp.le.s32.totalorder 1, %s14
      %p147 = scmp.lt.s32.totalorder %s14, 3
      %p148 = pnand %p146, %p147
      %p149 = pneg %p148
      // Predicated region
      $region25: #{tpu_custom_call.1} parent=5 // pred_check
        _
      $region26: #{tpu_custom_call.1} parent=5 // pred_check_branch
        %151 = sbr.rel (%p148) target = $region28
      $region27: #{tpu_custom_call.1} parent=5 // pred_region
        %s152 = ssub.s32 %s14, 1
        %s153 = sand.u32 %s41, 1
        %s154 = scalar_lea.sflag [#allocation3], %s153
        %s155 = sand.u32 %s41, 1
        %s156 = smul.addr %s155, 4
        %s157 = scalar_lea.vmem [#allocation2], %s156
        // Predicated region
        $region29: #{tpu_custom_call.1} parent=27 // pred_check
          %p158 = pneg %p54
        $region30: #{tpu_custom_call.1} parent=27 // pred_check_branch
          %160 = sbr.rel (%p158) target = $region32
        $region31: #{tpu_custom_call.1} parent=27 // pred_region
          %161 = dma.done %s154, 64
        $region32: #{tpu_custom_call.1} parent=27 // pred_fallthru
          _
        %s162 = sand.u32 %s41, 1
        %s163 = scalar_lea.sflag [#allocation3], %s162
        %s164 = sand.u32 %s41, 1
        %s165 = smul.addr %s164, 4
        %s166 = scalar_lea.vmem [#allocation2], %s165
        %p167 = pneg %p54
        %p168 = pneg %p51
        %p169 = pneg %p75
        %p170 = pneg %p72
        %p171 = pneg %p103
        %p172 = pneg %p100
        %s173 = sand.u32 %s90, 1
        %s174 = scalar_lea.sflag [#allocation4], %s173
        %s175 = sand.u32 %s90, 1
        %s176 = smul.addr %s175, 4
        %s177 = scalar_lea.vmem [#allocation5], %s176
        %s178 = smul.u32 2, %s24
        %s179 = smul.u32 2, %s24
        %v181 = vld [vmem:[%s1] sm:$0x3]
        %v182 = vld [vmem:[%s157] sm:$0xf]
        %v185 = vunpack.c.l.s4 1983009808
        %v186 = vunpack.c.0.s8 %v185
        %v187 = vlaneseq
        %v188 = vshrl.u32 %v187, 7
        %v189 = vsub.s32 %v186, %v188
        %v190 = vrot.slane %v182, %v189
        %v191 = vcombine.high %v190, %v190
        %vm192 = vcmask 31744
        %v194 = vsel %vm192, %v181, 0
        %vm196 = vcmask 1041408
        %v198 = vsel %vm196, %v190, 0
        %v201 = vsel %vm196, %v191, 0
        %203 = vmatprep.subr.bf16.mxu0 %v201
        %204 = vmatpush1.bf16.msra.mxu0 %v198
        %205 = vmatprep.subr.bf16.mxu0 0
        %206 = vmatpush1.bf16.msra.mxu0 0
        %207 = vmatprep.subr.bf16.mxu0 0
        %208 = vmatpush1.bf16.msra.mxu0 0
        %209 = vmatprep.subr.bf16.mxu0 0
        %210 = vmatpush1.bf16.msra.mxu0 0
        %211 = vmatprep.subr.bf16.mxu0 0
        %212 = vmatpush1.bf16.msra.mxu0 0
        %213 = vmatprep.subr.bf16.mxu0 0
        %214 = vmatpush1.bf16.msra.mxu0 0
        %215 = vmatprep.subr.bf16.mxu0 0
        %216 = vmatpush1.bf16.msra.mxu0 0
        %217 = vmatprep.subr.bf16.mxu0 0
        %218 = vmatpush1.bf16.msra.mxu0 0
        %219 = vmatprep.subr.bf16.mxu0 0
        %220 = vmatpush1.bf16.msra.mxu0 0
        %221 = vmatprep.subr.bf16.mxu0 0
        %222 = vmatpush1.bf16.msra.mxu0 0
        %223 = vmatprep.subr.bf16.mxu0 0
        %224 = vmatpush1.bf16.msra.mxu0 0
        %225 = vmatprep.subr.bf16.mxu0 0
        %226 = vmatpush1.bf16.msra.mxu0 0
        %227 = vmatprep.subr.bf16.mxu0 0
        %228 = vmatpush1.bf16.msra.mxu0 0
        %229 = vmatprep.subr.bf16.mxu0 0
        %230 = vmatpush1.bf16.msra.mxu0 0
        %231 = vmatprep.subr.bf16.mxu0 0
        %232 = vmatpush1.bf16.msra.mxu0 0
        %233 = vmatprep.subr.bf16.mxu0 0
        %234 = vmatpush1.bf16.msra.mxu0 0
        %235 = vmatprep.mubr.bf16.mxu0 0
        %236 = vmatmul.mubr.bf16.gmra.mrb[0].mxu0 %v194
        %v237 = vpop.f32.mrb[0].mxu0
        %v238 = vadd.f32 0.0, %v237
        %v239 = vpop.f32.mrb[0].mxu0
        %v240 = vadd.f32 0.0, %v239
        %v241 = vpop.f32.mrb[0].mxu0
        %v242 = vpop.f32.mrb[0].mxu0
        %243 = vdwg.mxu0
        %v244 = vpack.c.bf16 %v238, %v238
        %v245 = vpack.c.bf16 %v240, %v240
        %v248 = vcombine.low %v244, %v245
        %v250 = vunpack.c.l.s4 1983009808
        %v251 = vunpack.c.0.s8 %v250
        %v252 = vlaneseq
        %v253 = vshrl.u32 %v252, 7
        %v254 = vsub.s32 %v251, %v253
        %v255 = vrot.slane %v248, %v254
        %257 = vst [vmem:[%s177] sm:$0xf] %v255
        %s258 = sand.u32 %s90, 1
        %s259 = scalar_lea.sflag [#allocation4], %s258
        %s260 = sand.u32 %s90, 1
        %s261 = smul.addr %s260, 4
        %s262 = scalar_lea.vmem [#allocation5], %s261
        // Predicated region
        $region33: #{tpu_custom_call.1} parent=27 // pred_check
          %p263 = pneg %p100
        $region34: #{tpu_custom_call.1} parent=27 // pred_check_branch
          %265 = sbr.rel (%p263) target = $region36
        $region35: #{tpu_custom_call.1} parent=27 // pred_region
          %s266 = smul.u32 2, %s24
          %s268 = ssub.s32 64, 64
          %269 = vsyncadd %s259, %s268
          %s270 = smul.addr %s23, 2
          %s271 = sadd.s32 %s266, %s270
          %s272 = smul.addr %s271, 32
          %s273 = scalar_lea.hbm %s2, %s272
          %s275 = sshll.u32 %s262, 4
          %s276 = int_to_ptr.vmem [resolvable:$true] %s275
          %278 = dma.vmem_to_hbm [thread:$0]  %s276, 64, %s273, %s259
        $region36: #{tpu_custom_call.1} parent=27 // pred_fallthru
          _
      $region28: #{tpu_custom_call.1} parent=5 // pred_fallthru
        _
      %p279 = scmp.le.s32.totalorder 2, %s14
      // Predicated region
      $region37: #{tpu_custom_call.1} parent=5 // pred_check
        %p280 = pneg %p279
      $region38: #{tpu_custom_call.1} parent=5 // pred_check_branch
        %282 = sbr.rel (%p280) target = $region40
      $region39: #{tpu_custom_call.1} parent=5 // pred_region
        %s283 = ssub.s32 %s14, 2
        // Predicated region
        $region41: #{tpu_custom_call.1} parent=39 // pred_check
          %p284 = pneg %p106
        $region42: #{tpu_custom_call.1} parent=39 // pred_check_branch
          %286 = sbr.rel (%p284) target = $region44
        $region43: #{tpu_custom_call.1} parent=39 // pred_region
          %s287 = sand.u32 %s91, 1
          %s288 = scalar_lea.sflag [#allocation4], %s287
          %s289 = sand.u32 %s91, 1
          %s290 = smul.addr %s289, 4
          %s291 = scalar_lea.vmem [#allocation5], %s290
          %292 = dma.done %s288, 64
        $region44: #{tpu_custom_call.1} parent=39 // pred_fallthru
          _
      $region40: #{tpu_custom_call.1} parent=5 // pred_fallthru
        _
    $region6: #{tpu_custom_call.1} parent=1 // loop_footer
      %s18 = sadd.s32 1, %s14
    $region7: #{tpu_custom_call.1} parent=1 // loop_footer_branch
      %13 = sbr.rel target = $region3
    $region8: #{tpu_custom_call.1} parent=1 // loop_exit
      _
    %293 = vsyncpa [#allocation3], 1
    %s294 = scalar_lea.sflag [#allocation3], 1
    %295 = vsyncpa %s294, 1
    %296 = vsyncpa [#allocation4], 1
    %s297 = scalar_lea.sflag [#allocation4], 1
    %298 = vsyncpa %s297, 1

</llo_original>
